<compile_context>
chip_gen: v5e
topology: v5e:2x2
jax: 0.10.0
libtpu: 0.0.40
codegen_flags: <defaults>
</compile_context>

<pallas_src>
import functools
from typing import Any, NamedTuple

import jax
import jax.numpy as jnp
from jax.experimental import pallas as pl
from jax.experimental.pallas import tpu as pltpu

LANE = 128     # lane width: internal (hidden) feature dims padded to this
SUBLANE = 8    # f32 sublane multiple for the streamed batch tiles

# Flipped to False (once) if this JAX build rejects pipeline_mode=Buffered(1)
# on the top-level pallas_call pipeline; we then fall back to default buffering.
_SINGLE_BUFFER_WEIGHTS_OK = True


def _round_up(v, m):
    return ((v + m - 1) // m) * m


class QNetMeta(NamedTuple):
    obssize: int
    actsize: int
    compute_dtype: Any


def prepare_qnet_params(params, *, use_bf16=True):
    """Pad / cast the QNet parameters ONCE.  Cache the result and reuse it.

    params: list of (W, b) with W of shape (in, out) (transpose of PyTorch's
    nn.Linear weight) and b of shape (1, out).

    Hidden / contraction dims are zero-padded to a multiple of 128 lanes; the
    first layer's input dim (obssize) and the last layer's output dim
    (actsize) stay natural, so neither x nor the output need wrapper copies.
    """
    compute_dtype = jnp.bfloat16 if use_bf16 else jnp.float32
    obssize = params[0][0].shape[0]
    actsize = params[-1][0].shape[1]

    flat = []
    for i, (w, b) in enumerate(params):
        fi, fo = w.shape
        fi_p = fi if i == 0 else _round_up(fi, LANE)   # first in-dim = obssize
        fo_p = _round_up(fo, LANE)
        w_p = jnp.zeros((fi_p, fo_p), jnp.float32).at[:fi, :fo].set(w)
        b_p = jnp.zeros((1, fo_p), jnp.float32).at[:, :fo].set(b)
        flat.append(w_p.astype(compute_dtype))   # MXU operand dtype
        flat.append(b_p)                          # bias stays f32 (VPU math in f32)
    meta = QNetMeta(obssize=obssize, actsize=actsize, compute_dtype=compute_dtype)
    return tuple(flat), meta


def _qnet_kernel(*refs, compute_dtype, actsize):
    """refs = (x_ref, w0, b0, w1, b1, ..., wn, bn, out_ref).

    Matmuls accumulate in f32 (preferred_element_type); bias add + ReLU run
    in f32; `compute_dtype` is the MXU operand dtype (f32 or bf16).
    """
    x_ref, out_ref = refs[0], refs[-1]
    param_refs = refs[1:-1]
    n_layers = len(param_refs) // 2

    h = x_ref[...].astype(compute_dtype)
    for i in range(n_layers):
        w = param_refs[2 * i][...]          # resident VMEM weight (padded)
        b = param_refs[2 * i + 1][...]      # (1, out_pad) f32, broadcasts
        acc = jnp.dot(h, w, preferred_element_type=jnp.float32) + b
        if i < n_layers - 1:                # ReLU after every layer but the last
            acc = jnp.maximum(acc, 0.0)
            h = acc.astype(compute_dtype)
        else:
            h = acc
    # Store only the real action columns (output array is unpadded).
    out_ref[...] = h[:, :actsize].astype(out_ref.dtype)
    # TODO(synk): for depth >= 8, stack equal-shaped hidden layers and iterate
    # with lax.fori_loop to bound per-layer activation live ranges.


def _call(x, flat_params, meta, tb, grid, vmem_limit, flops, bytes_accessed,
          single_buffer_weights):
    B, obssize = x.shape
    actsize = meta.actsize

    in_specs = [pl.BlockSpec((tb, obssize), lambda i: (i, 0))]
    for a in flat_params:
        if single_buffer_weights:
            spec = pl.BlockSpec(a.shape, lambda i: (0, 0),
                                pipeline_mode=pl.Buffered(1))
        else:
            spec = pl.BlockSpec(a.shape, lambda i: (0, 0))
        in_specs.append(spec)
    out_spec = pl.BlockSpec((tb, actsize), lambda i: (i, 0))

    return pl.pallas_call(
        functools.partial(_qnet_kernel, compute_dtype=meta.compute_dtype,
                          actsize=actsize),
        out_shape=jax.ShapeDtypeStruct((B, actsize), jnp.float32),
        grid_spec=pltpu.PrefetchScalarGridSpec(
            num_scalar_prefetch=0,
            grid=grid,
            in_specs=in_specs,
            out_specs=out_spec,
        ),
        compiler_params=pltpu.CompilerParams(
            dimension_semantics=("parallel",),   # batch tiles shard across TCs
            vmem_limit_bytes=vmem_limit,
        ),
        cost_estimate=pl.CostEstimate(
            flops=flops, transcendentals=0, bytes_accessed=bytes_accessed),
    )(x, *flat_params)


def qnet_forward(x, flat_params, meta, *, batch_tile=1024):
    """Run the QNet MLP with a single pallas_call.

    x:           (B, obssize) float32
    flat_params: output of prepare_qnet_params (padded / cast once)
    """
    global _SINGLE_BUFFER_WEIGHTS_OK
    B, obssize = x.shape
    assert obssize == meta.obssize, "x feature dim does not match the params"
    actsize = meta.actsize

    weight_bytes = sum(int(a.size) * a.dtype.itemsize for a in flat_params)
    max_width = max(a.shape[-1] for a in flat_params)

    # Generation-aware VMEM cap (v7x: 64 MiB/core, v5e/v6e: 128 MiB).
    try:
        vmem_cap = int(pltpu.get_tpu_info().vmem_capacity_bytes)
    except Exception:
        vmem_cap = 64 << 20   # safe on every TPU generation
    vmem_budget = int(vmem_cap * 0.85)

    def vmem_needed(tile):
        stream = 2 * tile * (obssize + actsize) * 4     # double-buffered x/out tiles
        acts = 6 * tile * max_width * 4                 # live f32/bf16 activation chain
        return 2 * weight_bytes + stream + acts + (8 << 20)

    # Batch tile: full batch if it fits one tile, else a sublane-aligned tile;
    # shrink (rarely needed) until the per-step footprint fits the VMEM budget.
    if B <= batch_tile:
        tb = B
    else:
        tb = max(SUBLANE, (batch_tile // SUBLANE) * SUBLANE)
    while vmem_needed(tb) > vmem_budget and tb > SUBLANE:
        new_tb = max(SUBLANE, ((tb // 2) // SUBLANE) * SUBLANE)
        if new_tb == tb:
            break
        tb = new_tb

    grid = (pl.cdiv(B, tb),)
    vmem_limit = int(min(vmem_needed(tb), vmem_budget))

    n_layers = len(flat_params) // 2
    flops = sum(2 * B * flat_params[2 * i].shape[0] * flat_params[2 * i].shape[1]
                for i in range(n_layers))
    bytes_accessed = int(x.size * x.dtype.itemsize + B * actsize * 4 + weight_bytes)

    if _SINGLE_BUFFER_WEIGHTS_OK:
        try:
            return _call(x, flat_params, meta, tb, grid, vmem_limit, flops,
                         bytes_accessed, single_buffer_weights=True)
        except Exception:
            _SINGLE_BUFFER_WEIGHTS_OK = False   # fall back once, remember it
    return _call(x, flat_params, meta, tb, grid, vmem_limit, flops,
                 bytes_accessed, single_buffer_weights=False)


def init_qnet_params(key, obssize, actsize, hidden_dim, depth):
    """Deterministic synthetic parameters matching QNet.__init__ shapes."""
    dims = [obssize] + [hidden_dim] * (depth + 1) + [actsize]
    params = []
    for fan_in, fan_out in zip(dims[:-1], dims[1:]):
        key, kw, kb = jax.random.split(key, 3)
        # (in, out) layout == transpose of PyTorch's (out, in) weight
        w = jax.random.normal(kw, (fan_in, fan_out), jnp.float32) * 0.1
        b = jax.random.normal(kb, (1, fan_out), jnp.float32) * 0.1
        params.append((w, b))
    return params


def qnet_reference(x, params):
    """Pure-JAX reference of the PyTorch forward pass."""
    h = x
    n = len(params)
    for i, (w, b) in enumerate(params):
        h = h @ w + b
        if i < n - 1:
            h = jnp.maximum(h, 0.0)
    return h


if __name__ == "__main__":
    # Small shapes implied by the module: obs vector in, action values out.
    batch, obssize, actsize, hidden_dim, depth = 8, 16, 4, 32, 2

    key = jax.random.PRNGKey(0)
    key, kx = jax.random.split(key)
    x = jax.random.normal(kx, (batch, obssize), jnp.float32)
    params = init_qnet_params(key, obssize, actsize, hidden_dim, depth)
    ref = qnet_reference(x, params)

    # 1) f32 operands — exact match to the reference.
    f32_params, f32_meta = prepare_qnet_params(params, use_bf16=False)
    out = jax.block_until_ready(qnet_forward(x, f32_params, f32_meta))
    assert out.shape == (batch, actsize)
    assert jnp.allclose(out, ref, atol=1e-5, rtol=1e-5)

    # 2) default bf16 operands (f32 accumulation), params prepared once.
    bf16_params, bf16_meta = prepare_qnet_params(params)   # use_bf16=True default
    out_bf = jax.block_until_ready(qnet_forward(x, bf16_params, bf16_meta))
    assert out_bf.shape == (batch, actsize)
    assert jnp.allclose(out_bf, ref, atol=5e-2, rtol=5e-2)

    # 3) ragged multi-step grid (B not divisible by the tile) — f32 exact.
    key, kx2 = jax.random.split(key)
    x2 = jax.random.normal(kx2, (67, obssize), jnp.float32)
    ref2 = qnet_reference(x2, params)
    out2 = jax.block_until_ready(qnet_forward(x2, f32_params, f32_meta,
                                              batch_tile=16))
    assert out2.shape == (67, actsize)
    assert jnp.allclose(out2, ref2, atol=1e-5, rtol=1e-5)

    # 4) same ragged grid with bf16 operands.
    out3 = jax.block_until_ready(qnet_forward(x2, bf16_params, bf16_meta,
                                              batch_tile=16))
    assert out3.shape == (67, actsize)
    assert jnp.allclose(out3, ref2, atol=5e-2, rtol=5e-2)

    print("KERNEL_OK")
</pallas_src>

<mosaic_0001>
module attributes {stable_mosaic.version = 11 : i64} {
  func.func @_qnet_kernel(%arg0: i32, %arg1: memref<8x16xf32, #tpu.memory_space<vmem>>, %arg2: memref<16x128xf32, #tpu.memory_space<vmem>>, %arg3: memref<1x128xf32, #tpu.memory_space<vmem>>, %arg4: memref<128x128xf32, #tpu.memory_space<vmem>>, %arg5: memref<1x128xf32, #tpu.memory_space<vmem>>, %arg6: memref<128x128xf32, #tpu.memory_space<vmem>>, %arg7: memref<1x128xf32, #tpu.memory_space<vmem>>, %arg8: memref<128x128xf32, #tpu.memory_space<vmem>>, %arg9: memref<1x128xf32, #tpu.memory_space<vmem>>, %arg10: memref<8x4xf32, #tpu.memory_space<vmem>>) attributes {dimension_semantics = [#tpu.dimension_semantics<parallel>], iteration_bounds = array<i64: 1>, scalar_prefetch = 0 : i64, scratch_operands = 0 : i64, tpu.core_type = #tpu.core_type<tc>, window_params = [{transform_indices = @transform_0, window_bounds = array<i64: 8, 16>}, {pipeline_mode = #tpu.pipeline_mode<synchronous>, transform_indices = @transform_1, window_bounds = array<i64: 16, 128>}, {pipeline_mode = #tpu.pipeline_mode<synchronous>, transform_indices = @transform_2, window_bounds = array<i64: 1, 128>}, {pipeline_mode = #tpu.pipeline_mode<synchronous>, transform_indices = @transform_3, window_bounds = array<i64: 128, 128>}, {pipeline_mode = #tpu.pipeline_mode<synchronous>, transform_indices = @transform_4, window_bounds = array<i64: 1, 128>}, {pipeline_mode = #tpu.pipeline_mode<synchronous>, transform_indices = @transform_5, window_bounds = array<i64: 128, 128>}, {pipeline_mode = #tpu.pipeline_mode<synchronous>, transform_indices = @transform_6, window_bounds = array<i64: 1, 128>}, {pipeline_mode = #tpu.pipeline_mode<synchronous>, transform_indices = @transform_7, window_bounds = array<i64: 128, 128>}, {pipeline_mode = #tpu.pipeline_mode<synchronous>, transform_indices = @transform_8, window_bounds = array<i64: 1, 128>}, {transform_indices = @transform_9, window_bounds = array<i64: 8, 4>}]} {
    %c0 = arith.constant 0 : index
    %c0_0 = arith.constant 0 : index
    %0 = vector.load %arg1[%c0, %c0_0] : memref<8x16xf32, #tpu.memory_space<vmem>>, vector<8x16xf32>
    %c0_1 = arith.constant 0 : index
    %c0_2 = arith.constant 0 : index
    %1 = vector.load %arg2[%c0_1, %c0_2] : memref<16x128xf32, #tpu.memory_space<vmem>>, vector<16x128xf32>
    %c0_3 = arith.constant 0 : index
    %c0_4 = arith.constant 0 : index
    %2 = vector.load %arg3[%c0_3, %c0_4] : memref<1x128xf32, #tpu.memory_space<vmem>>, vector<1x128xf32>
    %cst = arith.constant dense<0.000000e+00> : vector<8x128xf32>
    %3 = tpu.matmul %0, %1, %cst {dimension_numbers = #tpu.dot_dimension_numbers<[1], [0], [0], [1], [0, 0, 1, 1], [], []>} : vector<8x16xf32>, vector<16x128xf32>, vector<8x128xf32> -> vector<8x128xf32>
    %4 = vector.broadcast %2 : vector<1x128xf32> to vector<8x128xf32>
    %5 = arith.addf %3, %4 : vector<8x128xf32>
    %cst_5 = arith.constant 0.000000e+00 : f32
    %6 = vector.broadcast %cst_5 : f32 to vector<8x128xf32>
    %7 = arith.maximumf %5, %6 : vector<8x128xf32>
    %c0_6 = arith.constant 0 : index
    %c0_7 = arith.constant 0 : index
    %8 = vector.load %arg4[%c0_6, %c0_7] : memref<128x128xf32, #tpu.memory_space<vmem>>, vector<128x128xf32>
    %c0_8 = arith.constant 0 : index
    %c0_9 = arith.constant 0 : index
    %9 = vector.load %arg5[%c0_8, %c0_9] : memref<1x128xf32, #tpu.memory_space<vmem>>, vector<1x128xf32>
    %cst_10 = arith.constant dense<0.000000e+00> : vector<8x128xf32>
    %10 = tpu.matmul %7, %8, %cst_10 {dimension_numbers = #tpu.dot_dimension_numbers<[1], [0], [0], [1], [0, 0, 1, 1], [], []>} : vector<8x128xf32>, vector<128x128xf32>, vector<8x128xf32> -> vector<8x128xf32>
    %11 = vector.broadcast %9 : vector<1x128xf32> to vector<8x128xf32>
    %12 = arith.addf %10, %11 : vector<8x128xf32>
    %cst_11 = arith.constant 0.000000e+00 : f32
    %13 = vector.broadcast %cst_11 : f32 to vector<8x128xf32>
    %14 = arith.maximumf %12, %13 : vector<8x128xf32>
    %c0_12 = arith.constant 0 : index
    %c0_13 = arith.constant 0 : index
    %15 = vector.load %arg6[%c0_12, %c0_13] : memref<128x128xf32, #tpu.memory_space<vmem>>, vector<128x128xf32>
    %c0_14 = arith.constant 0 : index
    %c0_15 = arith.constant 0 : index
    %16 = vector.load %arg7[%c0_14, %c0_15] : memref<1x128xf32, #tpu.memory_space<vmem>>, vector<1x128xf32>
    %cst_16 = arith.constant dense<0.000000e+00> : vector<8x128xf32>
    %17 = tpu.matmul %14, %15, %cst_16 {dimension_numbers = #tpu.dot_dimension_numbers<[1], [0], [0], [1], [0, 0, 1, 1], [], []>} : vector<8x128xf32>, vector<128x128xf32>, vector<8x128xf32> -> vector<8x128xf32>
    %18 = vector.broadcast %16 : vector<1x128xf32> to vector<8x128xf32>
    %19 = arith.addf %17, %18 : vector<8x128xf32>
    %cst_17 = arith.constant 0.000000e+00 : f32
    %20 = vector.broadcast %cst_17 : f32 to vector<8x128xf32>
    %21 = arith.maximumf %19, %20 : vector<8x128xf32>
    %c0_18 = arith.constant 0 : index
    %c0_19 = arith.constant 0 : index
    %22 = vector.load %arg8[%c0_18, %c0_19] : memref<128x128xf32, #tpu.memory_space<vmem>>, vector<128x128xf32>
    %c0_20 = arith.constant 0 : index
    %c0_21 = arith.constant 0 : index
    %23 = vector.load %arg9[%c0_20, %c0_21] : memref<1x128xf32, #tpu.memory_space<vmem>>, vector<1x128xf32>
    %cst_22 = arith.constant dense<0.000000e+00> : vector<8x128xf32>
    %24 = tpu.matmul %21, %22, %cst_22 {dimension_numbers = #tpu.dot_dimension_numbers<[1], [0], [0], [1], [0, 0, 1, 1], [], []>} : vector<8x128xf32>, vector<128x128xf32>, vector<8x128xf32> -> vector<8x128xf32>
    %25 = vector.broadcast %23 : vector<1x128xf32> to vector<8x128xf32>
    %26 = arith.addf %24, %25 : vector<8x128xf32>
    %27 = vector.extract_strided_slice %26 {offsets = [0, 0], sizes = [8, 4], strides = [1, 1]} : vector<8x128xf32> to vector<8x4xf32>
    %c0_23 = arith.constant 0 : index
    %c0_24 = arith.constant 0 : index
    %28 = vector.load %arg10[%c0_23, %c0_24] : memref<8x4xf32, #tpu.memory_space<vmem>>, vector<8x4xf32>
    tpu.vector_store %arg10[%c0_23, %c0_24], %27 {strides = array<i32>} : memref<8x4xf32, #tpu.memory_space<vmem>>, vector<8x4xf32>,
    return
  }
  func.func @transform_0(%arg0: i32) -> (i32, i32) {
    %c0_i32 = arith.constant 0 : i32
    %c0_i32_0 = arith.constant 0 : i32
    return %arg0, %c0_i32 : i32, i32
  }
  func.func @transform_1(%arg0: i32) -> (i32, i32) {
    %c0_i32 = arith.constant 0 : i32
    %c0_i32_0 = arith.constant 0 : i32
    %c0_i32_1 = arith.constant 0 : i32
    return %c0_i32, %c0_i32_0 : i32, i32
  }
  func.func @transform_2(%arg0: i32) -> (i32, i32) {
    %c0_i32 = arith.constant 0 : i32
    %c0_i32_0 = arith.constant 0 : i32
    %c0_i32_1 = arith.constant 0 : i32
    return %c0_i32, %c0_i32_0 : i32, i32
  }
  func.func @transform_3(%arg0: i32) -> (i32, i32) {
    %c0_i32 = arith.constant 0 : i32
    %c0_i32_0 = arith.constant 0 : i32
    %c0_i32_1 = arith.constant 0 : i32
    return %c0_i32, %c0_i32_0 : i32, i32
  }
  func.func @transform_4(%arg0: i32) -> (i32, i32) {
    %c0_i32 = arith.constant 0 : i32
    %c0_i32_0 = arith.constant 0 : i32
    %c0_i32_1 = arith.constant 0 : i32
    return %c0_i32, %c0_i32_0 : i32, i32
  }
  func.func @transform_5(%arg0: i32) -> (i32, i32) {
    %c0_i32 = arith.constant 0 : i32
    %c0_i32_0 = arith.constant 0 : i32
    %c0_i32_1 = arith.constant 0 : i32
    return %c0_i32, %c0_i32_0 : i32, i32
  }
  func.func @transform_6(%arg0: i32) -> (i32, i32) {
    %c0_i32 = arith.constant 0 : i32
    %c0_i32_0 = arith.constant 0 : i32
    %c0_i32_1 = arith.constant 0 : i32
    return %c0_i32, %c0_i32_0 : i32, i32
  }
  func.func @transform_7(%arg0: i32) -> (i32, i32) {
    %c0_i32 = arith.constant 0 : i32
    %c0_i32_0 = arith.constant 0 : i32
    %c0_i32_1 = arith.constant 0 : i32
    return %c0_i32, %c0_i32_0 : i32, i32
  }
  func.func @transform_8(%arg0: i32) -> (i32, i32) {
    %c0_i32 = arith.constant 0 : i32
    %c0_i32_0 = arith.constant 0 : i32
    %c0_i32_1 = arith.constant 0 : i32
    return %c0_i32, %c0_i32_0 : i32, i32
  }
  func.func @transform_9(%arg0: i32) -> (i32, i32) {
    %c0_i32 = arith.constant 0 : i32
    %c0_i32_0 = arith.constant 0 : i32
    return %arg0, %c0_i32 : i32, i32
  }
}

module attributes {stable_mosaic.version = 11 : i64} {
  func.func @_qnet_kernel(%arg0: i32, %arg1: memref<8x16xf32, #tpu.memory_space<vmem>>, %arg2: memref<16x128xf32, #tpu.memory_space<vmem>>, %arg3: memref<1x128xf32, #tpu.memory_space<vmem>>, %arg4: memref<128x128xf32, #tpu.memory_space<vmem>>, %arg5: memref<1x128xf32, #tpu.memory_space<vmem>>, %arg6: memref<128x128xf32, #tpu.memory_space<vmem>>, %arg7: memref<1x128xf32, #tpu.memory_space<vmem>>, %arg8: memref<128x128xf32, #tpu.memory_space<vmem>>, %arg9: memref<1x128xf32, #tpu.memory_space<vmem>>, %arg10: memref<8x4xf32, #tpu.memory_space<vmem>>) attributes {dimension_semantics = [#tpu.dimension_semantics<parallel>], iteration_bounds = array<i64: 1>, scalar_prefetch = 0 : i64, scratch_operands = 0 : i64, tpu.core_type = #tpu.core_type<tc>, window_params = [{transform_indices = @transform_0, window_bounds = array<i64: 8, 16>}, {pipeline_mode = #tpu.pipeline_mode<synchronous>, transform_indices = @transform_1, window_bounds = array<i64: 16, 128>}, {pipeline_mode = #tpu.pipeline_mode<synchronous>, transform_indices = @transform_2, window_bounds = array<i64: 1, 128>}, {pipeline_mode = #tpu.pipeline_mode<synchronous>, transform_indices = @transform_3, window_bounds = array<i64: 128, 128>}, {pipeline_mode = #tpu.pipeline_mode<synchronous>, transform_indices = @transform_4, window_bounds = array<i64: 1, 128>}, {pipeline_mode = #tpu.pipeline_mode<synchronous>, transform_indices = @transform_5, window_bounds = array<i64: 128, 128>}, {pipeline_mode = #tpu.pipeline_mode<synchronous>, transform_indices = @transform_6, window_bounds = array<i64: 1, 128>}, {pipeline_mode = #tpu.pipeline_mode<synchronous>, transform_indices = @transform_7, window_bounds = array<i64: 128, 128>}, {pipeline_mode = #tpu.pipeline_mode<synchronous>, transform_indices = @transform_8, window_bounds = array<i64: 1, 128>}, {transform_indices = @transform_9, window_bounds = array<i64: 8, 4>}]} {
    %c0 = arith.constant 0 : index
    %c0_0 = arith.constant 0 : index
    %0 = vector.load %arg1[%c0, %c0_0] : memref<8x16xf32, #tpu.memory_space<vmem>>, vector<8x16xf32>
    %c0_1 = arith.constant 0 : index
    %c0_2 = arith.constant 0 : index
    %1 = vector.load %arg2[%c0_1, %c0_2] : memref<16x128xf32, #tpu.memory_space<vmem>>, vector<16x128xf32>
    %c0_3 = arith.constant 0 : index
    %c0_4 = arith.constant 0 : index
    %2 = vector.load %arg3[%c0_3, %c0_4] : memref<1x128xf32, #tpu.memory_space<vmem>>, vector<1x128xf32>
    %cst = arith.constant dense<0.000000e+00> : vector<8x128xf32>
    %3 = tpu.matmul %0, %1, %cst {dimension_numbers = #tpu.dot_dimension_numbers<[1], [0], [0], [1], [0, 0, 1, 1], [], []>} : vector<8x16xf32>, vector<16x128xf32>, vector<8x128xf32> -> vector<8x128xf32>
    %4 = vector.broadcast %2 : vector<1x128xf32> to vector<8x128xf32>
    %5 = arith.addf %3, %4 : vector<8x128xf32>
    %cst_5 = arith.constant 0.000000e+00 : f32
    %6 = vector.broadcast %cst_5 : f32 to vector<8x128xf32>
    %7 = arith.maximumf %5, %6 : vector<8x128xf32>
    %c0_6 = arith.constant 0 : index
    %c0_7 = arith.constant 0 : index
    %8 = vector.load %arg4[%c0_6, %c0_7] : memref<128x128xf32, #tpu.memory_space<vmem>>, vector<128x128xf32>
    %c0_8 = arith.constant 0 : index
    %c0_9 = arith.constant 0 : index
    %9 = vector.load %arg5[%c0_8, %c0_9] : memref<1x128xf32, #tpu.memory_space<vmem>>, vector<1x128xf32>
    %cst_10 = arith.constant dense<0.000000e+00> : vector<8x128xf32>
    %10 = tpu.matmul %7, %8, %cst_10 {dimension_numbers = #tpu.dot_dimension_numbers<[1], [0], [0], [1], [0, 0, 1, 1], [], []>} : vector<8x128xf32>, vector<128x128xf32>, vector<8x128xf32> -> vector<8x128xf32>
    %11 = vector.broadcast %9 : vector<1x128xf32> to vector<8x128xf32>
    %12 = arith.addf %10, %11 : vector<8x128xf32>
    %cst_11 = arith.constant 0.000000e+00 : f32
    %13 = vector.broadcast %cst_11 : f32 to vector<8x128xf32>
    %14 = arith.maximumf %12, %13 : vector<8x128xf32>
    %c0_12 = arith.constant 0 : index
    %c0_13 = arith.constant 0 : index
    %15 = vector.load %arg6[%c0_12, %c0_13] : memref<128x128xf32, #tpu.memory_space<vmem>>, vector<128x128xf32>
    %c0_14 = arith.constant 0 : index
    %c0_15 = arith.constant 0 : index
    %16 = vector.load %arg7[%c0_14, %c0_15] : memref<1x128xf32, #tpu.memory_space<vmem>>, vector<1x128xf32>
    %cst_16 = arith.constant dense<0.000000e+00> : vector<8x128xf32>
    %17 = tpu.matmul %14, %15, %cst_16 {dimension_numbers = #tpu.dot_dimension_numbers<[1], [0], [0], [1], [0, 0, 1, 1], [], []>} : vector<8x128xf32>, vector<128x128xf32>, vector<8x128xf32> -> vector<8x128xf32>
    %18 = vector.broadcast %16 : vector<1x128xf32> to vector<8x128xf32>
    %19 = arith.addf %17, %18 : vector<8x128xf32>
    %cst_17 = arith.constant 0.000000e+00 : f32
    %20 = vector.broadcast %cst_17 : f32 to vector<8x128xf32>
    %21 = arith.maximumf %19, %20 : vector<8x128xf32>
    %c0_18 = arith.constant 0 : index
    %c0_19 = arith.constant 0 : index
    %22 = vector.load %arg8[%c0_18, %c0_19] : memref<128x128xf32, #tpu.memory_space<vmem>>, vector<128x128xf32>
    %c0_20 = arith.constant 0 : index
    %c0_21 = arith.constant 0 : index
    %23 = vector.load %arg9[%c0_20, %c0_21] : memref<1x128xf32, #tpu.memory_space<vmem>>, vector<1x128xf32>
    %cst_22 = arith.constant dense<0.000000e+00> : vector<8x128xf32>
    %24 = tpu.matmul %21, %22, %cst_22 {dimension_numbers = #tpu.dot_dimension_numbers<[1], [0], [0], [1], [0, 0, 1, 1], [], []>} : vector<8x128xf32>, vector<128x128xf32>, vector<8x128xf32> -> vector<8x128xf32>
    %25 = vector.broadcast %23 : vector<1x128xf32> to vector<8x128xf32>
    %26 = arith.addf %24, %25 : vector<8x128xf32>
    %27 = vector.extract_strided_slice %26 {offsets = [0, 0], sizes = [8, 4], strides = [1, 1]} : vector<8x128xf32> to vector<8x4xf32>
    %c0_23 = arith.constant 0 : index
    %c0_24 = arith.constant 0 : index
    %28 = vector.load %arg10[%c0_23, %c0_24] : memref<8x4xf32, #tpu.memory_space<vmem>>, vector<8x4xf32>
    tpu.vector_store %arg10[%c0_23, %c0_24], %27 {strides = array<i32>} : memref<8x4xf32, #tpu.memory_space<vmem>>, vector<8x4xf32>,
    return
  }
  func.func @transform_0(%arg0: i32) -> (i32, i32) {
    %c0_i32 = arith.constant 0 : i32
    %c0_i32_0 = arith.constant 0 : i32
    return %arg0, %c0_i32 : i32, i32
  }
  func.func @transform_1(%arg0: i32) -> (i32, i32) {
    %c0_i32 = arith.constant 0 : i32
    %c0_i32_0 = arith.constant 0 : i32
    %c0_i32_1 = arith.constant 0 : i32
    return %c0_i32, %c0_i32_0 : i32, i32
  }
  func.func @transform_2(%arg0: i32) -> (i32, i32) {
    %c0_i32 = arith.constant 0 : i32
    %c0_i32_0 = arith.constant 0 : i32
    %c0_i32_1 = arith.constant 0 : i32
    return %c0_i32, %c0_i32_0 : i32, i32
  }
  func.func @transform_3(%arg0: i32) -> (i32, i32) {
    %c0_i32 = arith.constant 0 : i32
    %c0_i32_0 = arith.constant 0 : i32
    %c0_i32_1 = arith.constant 0 : i32
    return %c0_i32, %c0_i32_0 : i32, i32
  }
  func.func @transform_4(%arg0: i32) -> (i32, i32) {
    %c0_i32 = arith.constant 0 : i32
    %c0_i32_0 = arith.constant 0 : i32
    %c0_i32_1 = arith.constant 0 : i32
    return %c0_i32, %c0_i32_0 : i32, i32
  }
  func.func @transform_5(%arg0: i32) -> (i32, i32) {
    %c0_i32 = arith.constant 0 : i32
    %c0_i32_0 = arith.constant 0 : i32
    %c0_i32_1 = arith.constant 0 : i32
    return %c0_i32, %c0_i32_0 : i32, i32
  }
  func.func @transform_6(%arg0: i32) -> (i32, i32) {
    %c0_i32 = arith.constant 0 : i32
    %c0_i32_0 = arith.constant 0 : i32
    %c0_i32_1 = arith.constant 0 : i32
    return %c0_i32, %c0_i32_0 : i32, i32
  }
  func.func @transform_7(%arg0: i32) -> (i32, i32) {
    %c0_i32 = arith.constant 0 : i32
    %c0_i32_0 = arith.constant 0 : i32
    %c0_i32_1 = arith.constant 0 : i32
    return %c0_i32, %c0_i32_0 : i32, i32
  }
  func.func @transform_8(%arg0: i32) -> (i32, i32) {
    %c0_i32 = arith.constant 0 : i32
    %c0_i32_0 = arith.constant 0 : i32
    %c0_i32_1 = arith.constant 0 : i32
    return %c0_i32, %c0_i32_0 : i32, i32
  }
  func.func @transform_9(%arg0: i32) -> (i32, i32) {
    %c0_i32 = arith.constant 0 : i32
    %c0_i32_0 = arith.constant 0 : i32
    return %arg0, %c0_i32 : i32, i32
  }
}

</mosaic_0001>

<llo_original>
// kernel: tpu_custom_call.1
$region0: #{tpu_custom_call.1}
  #allocation0 [shape = 'u32[]', space=smem, size = 0x4, offset = 0x4, fixed_abs, tag = 'smem constant byte address 0x4 - core index']
  #allocation1 [shape = 'u32[72,128]{1,0:T(1,128)}', space=vmem, size = 0x9000, scoped, tag = 'internal scratch']
  %s0 = inlined_call_operand.hbm [shape: f32[8,16], index: 0, kind: input, shape index: {}]
  %s1 = inlined_call_operand.hbm [shape: f32[16,128], index: 1, kind: input, shape index: {}]
  %s2 = inlined_call_operand.vmem [shape: f32[1,128], index: 2, kind: input, shape index: {}]
  %s3 = inlined_call_operand.hbm [shape: f32[128,128], index: 3, kind: input, shape index: {}]
  %s4 = inlined_call_operand.vmem [shape: f32[1,128], index: 4, kind: input, shape index: {}]
  %s5 = inlined_call_operand.hbm [shape: f32[128,128], index: 5, kind: input, shape index: {}]
  %s6 = inlined_call_operand.vmem [shape: f32[1,128], index: 6, kind: input, shape index: {}]
  %s7 = inlined_call_operand.hbm [shape: f32[128,128], index: 7, kind: input, shape index: {}]
  %s8 = inlined_call_operand.vmem [shape: f32[1,128], index: 8, kind: input, shape index: {}]
  %s9 = inlined_call_operand.vmem [shape: f32[8,4], index: 9, kind: output, shape index: {}]
  %s10 = sld [smem:[#allocation0]]
  $region66: #{tpu_custom_call.1} parent=0
    _
  %s12 = ssub.s32 1, %s10
  %s13 = scalar_select 0, %s12, %s10
  $region1: #{tpu_custom_call.1} parent=0
    #allocation2 [shape = 'u8[4096]{0}', space=vmem, size = 0x1000, scoped, tag = 'input window, operand 0, single buffered']
    #allocation3 [shape = 's32[1]{0}', space=sflag, size = 0x4, scoped, tag = 'scoped memory for tpu_custom_call.1']
    #allocation4 [shape = 'u8[8192]{0}', space=vmem, size = 0x2000, scoped, tag = 'input window, operand 1, single buffered']
    #allocation5 [shape = 's32[1]{0}', space=sflag, size = 0x4, scoped, tag = 'scoped memory for tpu_custom_call.1']
    #allocation6 [shape = 'u8[65536]{0}', space=vmem, size = 0x10000, scoped, tag = 'input window, operand 3, single buffered']
    #allocation7 [shape = 'u8[65536]{0}', space=vmem, size = 0x10000, scoped, tag = 'input window, operand 5, single buffered']
    #allocation8 [shape = 's32[1]{0}', space=sflag, size = 0x4, scoped, tag = 'scoped memory for tpu_custom_call.1']
    #allocation9 [shape = 'u8[65536]{0}', space=vmem, size = 0x10000, scoped, tag = 'input window, operand 7, single buffered']
    %14 = vsyncpa [#allocation3], 0
    %15 = vsyncpa [#allocation5], 0
    %16 = vsyncpa [#allocation8], 0
    // Predicated region
    $region2: #{tpu_custom_call.1} parent=1 // pred_check
      _
    $region3: #{tpu_custom_call.1} parent=1 // pred_check_branch
      %18 = sbr.rel (0) target = $region5
    $region4: #{tpu_custom_call.1} parent=1 // pred_region
      %20 = vsyncadd [#allocation3], 0
      %s22 = sshll.u32 %s0, 4
      %s23 = int_to_ptr.hbm [resolvable:$true] %s22
      %s24 = sshll.u32 [#allocation2], 4
      %s25 = int_to_ptr.vmem [resolvable:$true] %s24
      %27 = dma.hbm_to_vmem [thread:$0]  %s23, 128, %s25, [#allocation3]
    $region5: #{tpu_custom_call.1} parent=1 // pred_fallthru
      _
    // Predicated region
    $region6: #{tpu_custom_call.1} parent=1 // pred_check
      _
    $region7: #{tpu_custom_call.1} parent=1 // pred_check_branch
      %29 = sbr.rel (0) target = $region9
    $region8: #{tpu_custom_call.1} parent=1 // pred_region
      %31 = vsyncadd [#allocation5], 0
      %s32 = sshll.u32 %s1, 4
      %s33 = int_to_ptr.hbm [resolvable:$true] %s32
      %s34 = sshll.u32 [#allocation4], 4
      %s35 = int_to_ptr.vmem [resolvable:$true] %s34
      %40 = dma.hbm_to_vmem [thread:$0]  %s33, 256, %s35, [#allocation5], 128, 128, 8
    $region9: #{tpu_custom_call.1} parent=1 // pred_fallthru
      _
    // Predicated region
    $region10: #{tpu_custom_call.1} parent=1 // pred_check
      _
    $region11: #{tpu_custom_call.1} parent=1 // pred_check_branch
      %42 = sbr.rel (0) target = $region13
    $region12: #{tpu_custom_call.1} parent=1 // pred_region
      _
    $region13: #{tpu_custom_call.1} parent=1 // pred_fallthru
      _
    // Predicated region
    $region14: #{tpu_custom_call.1} parent=1 // pred_check
      _
    $region15: #{tpu_custom_call.1} parent=1 // pred_check_branch
      %44 = sbr.rel (0) target = $region17
    $region16: #{tpu_custom_call.1} parent=1 // pred_region
      %46 = vsyncadd [#allocation5], 0
      %s47 = sshll.u32 %s3, 4
      %s48 = int_to_ptr.hbm [resolvable:$true] %s47
      %s49 = sshll.u32 [#allocation6], 4
      %s50 = int_to_ptr.vmem [resolvable:$true] %s49
      %55 = dma.hbm_to_vmem [thread:$0]  %s48, 2048, %s50, [#allocation5], 128, 128, 8
    $region17: #{tpu_custom_call.1} parent=1 // pred_fallthru
      _
    // Predicated region
    $region18: #{tpu_custom_call.1} parent=1 // pred_check
      _
    $region19: #{tpu_custom_call.1} parent=1 // pred_check_branch
      %57 = sbr.rel (0) target = $region21
    $region20: #{tpu_custom_call.1} parent=1 // pred_region
      _
    $region21: #{tpu_custom_call.1} parent=1 // pred_fallthru
      _
    // Predicated region
    $region22: #{tpu_custom_call.1} parent=1 // pred_check
      _
    $region23: #{tpu_custom_call.1} parent=1 // pred_check_branch
      %59 = sbr.rel (0) target = $region25
    $region24: #{tpu_custom_call.1} parent=1 // pred_region
      %61 = vsyncadd [#allocation8], 0
      %s62 = sshll.u32 %s5, 4
      %s63 = int_to_ptr.hbm [resolvable:$true] %s62
      %s64 = sshll.u32 [#allocation7], 4
      %s65 = int_to_ptr.vmem [resolvable:$true] %s64
      %70 = dma.hbm_to_vmem [thread:$0]  %s63, 2048, %s65, [#allocation8], 128, 128, 8
    $region25: #{tpu_custom_call.1} parent=1 // pred_fallthru
      _
    // Predicated region
    $region26: #{tpu_custom_call.1} parent=1 // pred_check
      _
    $region27: #{tpu_custom_call.1} parent=1 // pred_check_branch
      %72 = sbr.rel (0) target = $region29
    $region28: #{tpu_custom_call.1} parent=1 // pred_region
      _
    $region29: #{tpu_custom_call.1} parent=1 // pred_fallthru
      _
    // Predicated region
    $region30: #{tpu_custom_call.1} parent=1 // pred_check
      _
    $region31: #{tpu_custom_call.1} parent=1 // pred_check_branch
      %74 = sbr.rel (0) target = $region33
    $region32: #{tpu_custom_call.1} parent=1 // pred_region
      %76 = vsyncadd [#allocation8], 0
      %s77 = sshll.u32 %s7, 4
      %s78 = int_to_ptr.hbm [resolvable:$true] %s77
      %s79 = sshll.u32 [#allocation9], 4
      %s80 = int_to_ptr.vmem [resolvable:$true] %s79
      %85 = dma.hbm_to_vmem [thread:$0]  %s78, 2048, %s80, [#allocation8], 128, 128, 8
    $region33: #{tpu_custom_call.1} parent=1 // pred_fallthru
      _
    // Predicated region
    $region34: #{tpu_custom_call.1} parent=1 // pred_check
      _
    $region35: #{tpu_custom_call.1} parent=1 // pred_check_branch
      %87 = sbr.rel (0) target = $region37
    $region36: #{tpu_custom_call.1} parent=1 // pred_region
      _
    $region37: #{tpu_custom_call.1} parent=1 // pred_fallthru
      _
    // Predicated region
    $region38: #{tpu_custom_call.1} parent=1 // pred_check
      _
    $region39: #{tpu_custom_call.1} parent=1 // pred_check_branch
      %89 = sbr.rel (0) target = $region41
    $region40: #{tpu_custom_call.1} parent=1 // pred_region
      %91 = dma.done [#allocation3], 128
    $region41: #{tpu_custom_call.1} parent=1 // pred_fallthru
      _
    // Predicated region
    $region42: #{tpu_custom_call.1} parent=1 // pred_check
      _
    $region43: #{tpu_custom_call.1} parent=1 // pred_check_branch
      %93 = sbr.rel (0) target = $region45
    $region44: #{tpu_custom_call.1} parent=1 // pred_region
      %95 = dma.done [#allocation5], 256
    $region45: #{tpu_custom_call.1} parent=1 // pred_fallthru
      _
    // Predicated region
    $region46: #{tpu_custom_call.1} parent=1 // pred_check
      _
    $region47: #{tpu_custom_call.1} parent=1 // pred_check_branch
      %97 = sbr.rel (0) target = $region49
    $region48: #{tpu_custom_call.1} parent=1 // pred_region
      %99 = dma.done [#allocation5], 2048
    $region49: #{tpu_custom_call.1} parent=1 // pred_fallthru
      _
    // Predicated region
    $region50: #{tpu_custom_call.1} parent=1 // pred_check
      _
    $region51: #{tpu_custom_call.1} parent=1 // pred_check_branch
      %101 = sbr.rel (0) target = $region53
    $region52: #{tpu_custom_call.1} parent=1 // pred_region
      %103 = dma.done [#allocation8], 2048
    $region53: #{tpu_custom_call.1} parent=1 // pred_fallthru
      _
    // Predicated region
    $region54: #{tpu_custom_call.1} parent=1 // pred_check
      _
    $region55: #{tpu_custom_call.1} parent=1 // pred_check_branch
      %105 = sbr.rel (0) target = $region57
    $region56: #{tpu_custom_call.1} parent=1 // pred_region
      %107 = dma.done [#allocation8], 2048
    $region57: #{tpu_custom_call.1} parent=1 // pred_fallthru
      _
    %v108 = vld [vmem:[#allocation2] sm:$0xff]
    %v109 = vld [vmem:[#allocation4] sm:$0xff]
    %v110 = vld [vmem:[#allocation4 + $0x8] sm:$0xff]
    %v111 = vld [vmem:[%s2] sm:$0x1]
    %v113 = vperm.slane %v111, 0
    %vm115 = vcmask 130048
    %v117 = vsel %vm115, %v108, 0
    %119 = vmatpush.msra.mxu0 0.0
    %120 = vmatpush.msra.mxu0 0.0
    %121 = vmatpush.msra.mxu0 0.0
    %122 = vmatpush.msra.mxu0 0.0
    %123 = vmatpush.msra.mxu0 0.0
    %124 = vmatpush.msra.mxu0 0.0
    %125 = vmatpush.msra.mxu0 0.0
    %126 = vmatpush.msra.mxu0 0.0
    %127 = vmatpush.msra.mxu0 0.0
    %128 = vmatpush.msra.mxu0 0.0
    %129 = vmatpush.msra.mxu0 0.0
    %130 = vmatpush.msra.mxu0 0.0
    %131 = vmatpush.msra.mxu0 0.0
    %132 = vmatpush.msra.mxu0 0.0
    %133 = vmatpush.msra.mxu0 %v110
    %134 = vmatpush.msra.mxu0 %v109
    %135 = vmatmul.f32.gmra.mxu0 %v117
    %v136 = vpop.f32.mrf.mxu0
    %v137 = vadd.f32 %v113, %v136
    %138 = vdwg.mxu0
    %v139 = vmax.f32 %v137, 0.0
    %v140 = vld [vmem:[#allocation6] sm:$0xff]
    %v141 = vld [vmem:[#allocation6 + $0x8] sm:$0xff]
    %v142 = vld [vmem:[#allocation6 + $0x10] sm:$0xff]
    %v143 = vld [vmem:[#allocation6 + $0x18] sm:$0xff]
    %v144 = vld [vmem:[#allocation6 + $0x20] sm:$0xff]
    %v145 = vld [vmem:[#allocation6 + $0x28] sm:$0xff]
    %v146 = vld [vmem:[#allocation6 + $0x30] sm:$0xff]
    %v147 = vld [vmem:[#allocation6 + $0x38] sm:$0xff]
    %v148 = vld [vmem:[#allocation6 + $0x40] sm:$0xff]
    %v149 = vld [vmem:[#allocation6 + $0x48] sm:$0xff]
    %v150 = vld [vmem:[#allocation6 + $0x50] sm:$0xff]
    %v151 = vld [vmem:[#allocation6 + $0x58] sm:$0xff]
    %v152 = vld [vmem:[#allocation6 + $0x60] sm:$0xff]
    %v153 = vld [vmem:[#allocation6 + $0x68] sm:$0xff]
    %v154 = vld [vmem:[#allocation6 + $0x70] sm:$0xff]
    %v155 = vld [vmem:[#allocation6 + $0x78] sm:$0xff]
    %v156 = vld [vmem:[%s4] sm:$0x1]
    %v158 = vperm.slane %v156, 0
    %160 = vmatpush.msra.mxu0 %v155
    %161 = vmatpush.msra.mxu0 %v154
    %162 = vmatpush.msra.mxu0 %v153
    %163 = vmatpush.msra.mxu0 %v152
    %164 = vmatpush.msra.mxu0 %v151
    %165 = vmatpush.msra.mxu0 %v150
    %166 = vmatpush.msra.mxu0 %v149
    %167 = vmatpush.msra.mxu0 %v148
    %168 = vmatpush.msra.mxu0 %v147
    %169 = vmatpush.msra.mxu0 %v146
    %170 = vmatpush.msra.mxu0 %v145
    %171 = vmatpush.msra.mxu0 %v144
    %172 = vmatpush.msra.mxu0 %v143
    %173 = vmatpush.msra.mxu0 %v142
    %174 = vmatpush.msra.mxu0 %v141
    %175 = vmatpush.msra.mxu0 %v140
    %176 = vmatmul.f32.gmra.mxu0 %v139
    %v177 = vpop.f32.mrf.mxu0
    %v178 = vadd.f32 %v158, %v177
    %179 = vdwg.mxu0
    %v180 = vmax.f32 %v178, 0.0
    %v181 = vld [vmem:[#allocation7] sm:$0xff]
    %v182 = vld [vmem:[#allocation7 + $0x8] sm:$0xff]
    %v183 = vld [vmem:[#allocation7 + $0x10] sm:$0xff]
    %v184 = vld [vmem:[#allocation7 + $0x18] sm:$0xff]
    %v185 = vld [vmem:[#allocation7 + $0x20] sm:$0xff]
    %v186 = vld [vmem:[#allocation7 + $0x28] sm:$0xff]
    %v187 = vld [vmem:[#allocation7 + $0x30] sm:$0xff]
    %v188 = vld [vmem:[#allocation7 + $0x38] sm:$0xff]
    %v189 = vld [vmem:[#allocation7 + $0x40] sm:$0xff]
    %v190 = vld [vmem:[#allocation7 + $0x48] sm:$0xff]
    %v191 = vld [vmem:[#allocation7 + $0x50] sm:$0xff]
    %v192 = vld [vmem:[#allocation7 + $0x58] sm:$0xff]
    %v193 = vld [vmem:[#allocation7 + $0x60] sm:$0xff]
    %v194 = vld [vmem:[#allocation7 + $0x68] sm:$0xff]
    %v195 = vld [vmem:[#allocation7 + $0x70] sm:$0xff]
    %v196 = vld [vmem:[#allocation7 + $0x78] sm:$0xff]
    %v197 = vld [vmem:[%s6] sm:$0x1]
    %v199 = vperm.slane %v197, 0
    %201 = vmatpush.msra.mxu0 %v196
    %202 = vmatpush.msra.mxu0 %v195
    %203 = vmatpush.msra.mxu0 %v194
    %204 = vmatpush.msra.mxu0 %v193
    %205 = vmatpush.msra.mxu0 %v192
    %206 = vmatpush.msra.mxu0 %v191
    %207 = vmatpush.msra.mxu0 %v190
    %208 = vmatpush.msra.mxu0 %v189
    %209 = vmatpush.msra.mxu0 %v188
    %210 = vmatpush.msra.mxu0 %v187
    %211 = vmatpush.msra.mxu0 %v186
    %212 = vmatpush.msra.mxu0 %v185
    %213 = vmatpush.msra.mxu0 %v184
    %214 = vmatpush.msra.mxu0 %v183
    %215 = vmatpush.msra.mxu0 %v182
    %216 = vmatpush.msra.mxu0 %v181
    %217 = vmatmul.f32.gmra.mxu0 %v180
    %v218 = vpop.f32.mrf.mxu0
    %v219 = vadd.f32 %v199, %v218
    %220 = vdwg.mxu0
    %v221 = vmax.f32 %v219, 0.0
    %v222 = vld [vmem:[#allocation9] sm:$0xff]
    %v223 = vld [vmem:[#allocation9 + $0x8] sm:$0xff]
    %v224 = vld [vmem:[#allocation9 + $0x10] sm:$0xff]
    %v225 = vld [vmem:[#allocation9 + $0x18] sm:$0xff]
    %v226 = vld [vmem:[#allocation9 + $0x20] sm:$0xff]
    %v227 = vld [vmem:[#allocation9 + $0x28] sm:$0xff]
    %v228 = vld [vmem:[#allocation9 + $0x30] sm:$0xff]
    %v229 = vld [vmem:[#allocation9 + $0x38] sm:$0xff]
    %v230 = vld [vmem:[#allocation9 + $0x40] sm:$0xff]
    %v231 = vld [vmem:[#allocation9 + $0x48] sm:$0xff]
    %v232 = vld [vmem:[#allocation9 + $0x50] sm:$0xff]
    %v233 = vld [vmem:[#allocation9 + $0x58] sm:$0xff]
    %v234 = vld [vmem:[#allocation9 + $0x60] sm:$0xff]
    %v235 = vld [vmem:[#allocation9 + $0x68] sm:$0xff]
    %v236 = vld [vmem:[#allocation9 + $0x70] sm:$0xff]
    %v237 = vld [vmem:[#allocation9 + $0x78] sm:$0xff]
    %v238 = vld [vmem:[%s8] sm:$0x1]
    %v240 = vperm.slane %v238, 0
    %242 = vmatpush.msra.mxu0 %v237
    %243 = vmatpush.msra.mxu0 %v236
    %244 = vmatpush.msra.mxu0 %v235
    %245 = vmatpush.msra.mxu0 %v234
    %246 = vmatpush.msra.mxu0 %v233
    %247 = vmatpush.msra.mxu0 %v232
    %248 = vmatpush.msra.mxu0 %v231
    %249 = vmatpush.msra.mxu0 %v230
    %250 = vmatpush.msra.mxu0 %v229
    %251 = vmatpush.msra.mxu0 %v228
    %252 = vmatpush.msra.mxu0 %v227
    %253 = vmatpush.msra.mxu0 %v226
    %254 = vmatpush.msra.mxu0 %v225
    %255 = vmatpush.msra.mxu0 %v224
    %256 = vmatpush.msra.mxu0 %v223
    %257 = vmatpush.msra.mxu0 %v222
    %258 = vmatmul.f32.gmra.mxu0 %v221
    %v259 = vpop.f32.mrf.mxu0
    %v260 = vadd.f32 %v240, %v259
    %261 = vdwg.mxu0
    %vm262 = vcmask 31744
    %263 = vst.msk [vmem:[%s9] sm:$0xff] %vm262, %v260
    // Predicated region
    $region58: #{tpu_custom_call.1} parent=1 // pred_check
      _
    $region59: #{tpu_custom_call.1} parent=1 // pred_check_branch
      %265 = sbr.rel (0) target = $region61
    $region60: #{tpu_custom_call.1} parent=1 // pred_region
      _
    $region61: #{tpu_custom_call.1} parent=1 // pred_fallthru
      _
    // Predicated region
    $region62: #{tpu_custom_call.1} parent=1 // pred_check
      _
    $region63: #{tpu_custom_call.1} parent=1 // pred_check_branch
      %267 = sbr.rel (0) target = $region65
    $region64: #{tpu_custom_call.1} parent=1 // pred_region
      _
    $region65: #{tpu_custom_call.1} parent=1 // pred_fallthru
      _
    %268 = vsyncpa [#allocation3], 1
    %269 = vsyncpa [#allocation5], 1
    %270 = vsyncpa [#allocation8], 1

// kernel: tpu_custom_call.1
$region0: #{tpu_custom_call.1}
  #allocation0 [shape = 'u32[]', space=smem, size = 0x4, offset = 0x4, fixed_abs, tag = 'smem constant byte address 0x4 - core index']
  #allocation1 [shape = 'u32[72,128]{1,0:T(1,128)}', space=vmem, size = 0x9000, scoped, tag = 'internal scratch']
  %s0 = inlined_call_operand.hbm [shape: f32[8,16], index: 0, kind: input, shape index: {}]
  %s1 = inlined_call_operand.hbm [shape: f32[16,128], index: 1, kind: input, shape index: {}]
  %s2 = inlined_call_operand.vmem [shape: f32[1,128], index: 2, kind: input, shape index: {}]
  %s3 = inlined_call_operand.hbm [shape: f32[128,128], index: 3, kind: input, shape index: {}]
  %s4 = inlined_call_operand.vmem [shape: f32[1,128], index: 4, kind: input, shape index: {}]
  %s5 = inlined_call_operand.hbm [shape: f32[128,128], index: 5, kind: input, shape index: {}]
  %s6 = inlined_call_operand.vmem [shape: f32[1,128], index: 6, kind: input, shape index: {}]
  %s7 = inlined_call_operand.hbm [shape: f32[128,128], index: 7, kind: input, shape index: {}]
  %s8 = inlined_call_operand.vmem [shape: f32[1,128], index: 8, kind: input, shape index: {}]
  %s9 = inlined_call_operand.vmem [shape: f32[8,4], index: 9, kind: output, shape index: {}]
  %s10 = sld [smem:[#allocation0]]
  $region66: #{tpu_custom_call.1} parent=0
    _
  %s12 = ssub.s32 1, %s10
  %s13 = scalar_select 0, %s12, %s10
  $region1: #{tpu_custom_call.1} parent=0
    #allocation2 [shape = 'u8[4096]{0}', space=vmem, size = 0x1000, scoped, tag = 'input window, operand 0, single buffered']
    #allocation3 [shape = 's32[1]{0}', space=sflag, size = 0x4, scoped, tag = 'scoped memory for tpu_custom_call.1']
    #allocation4 [shape = 'u8[8192]{0}', space=vmem, size = 0x2000, scoped, tag = 'input window, operand 1, single buffered']
    #allocation5 [shape = 's32[1]{0}', space=sflag, size = 0x4, scoped, tag = 'scoped memory for tpu_custom_call.1']
    #allocation6 [shape = 'u8[65536]{0}', space=vmem, size = 0x10000, scoped, tag = 'input window, operand 3, single buffered']
    #allocation7 [shape = 'u8[65536]{0}', space=vmem, size = 0x10000, scoped, tag = 'input window, operand 5, single buffered']
    #allocation8 [shape = 's32[1]{0}', space=sflag, size = 0x4, scoped, tag = 'scoped memory for tpu_custom_call.1']
    #allocation9 [shape = 'u8[65536]{0}', space=vmem, size = 0x10000, scoped, tag = 'input window, operand 7, single buffered']
    %14 = vsyncpa [#allocation3], 0
    %15 = vsyncpa [#allocation5], 0
    %16 = vsyncpa [#allocation8], 0
    // Predicated region
    $region2: #{tpu_custom_call.1} parent=1 // pred_check
      _
    $region3: #{tpu_custom_call.1} parent=1 // pred_check_branch
      %18 = sbr.rel (0) target = $region5
    $region4: #{tpu_custom_call.1} parent=1 // pred_region
      %20 = vsyncadd [#allocation3], 0
      %s22 = sshll.u32 %s0, 4
      %s23 = int_to_ptr.hbm [resolvable:$true] %s22
      %s24 = sshll.u32 [#allocation2], 4
      %s25 = int_to_ptr.vmem [resolvable:$true] %s24
      %27 = dma.hbm_to_vmem [thread:$0]  %s23, 128, %s25, [#allocation3]
    $region5: #{tpu_custom_call.1} parent=1 // pred_fallthru
      _
    // Predicated region
    $region6: #{tpu_custom_call.1} parent=1 // pred_check
      _
    $region7: #{tpu_custom_call.1} parent=1 // pred_check_branch
      %29 = sbr.rel (0) target = $region9
    $region8: #{tpu_custom_call.1} parent=1 // pred_region
      %31 = vsyncadd [#allocation5], 0
      %s32 = sshll.u32 %s1, 4
      %s33 = int_to_ptr.hbm [resolvable:$true] %s32
      %s34 = sshll.u32 [#allocation4], 4
      %s35 = int_to_ptr.vmem [resolvable:$true] %s34
      %40 = dma.hbm_to_vmem [thread:$0]  %s33, 256, %s35, [#allocation5], 128, 128, 8
    $region9: #{tpu_custom_call.1} parent=1 // pred_fallthru
      _
    // Predicated region
    $region10: #{tpu_custom_call.1} parent=1 // pred_check
      _
    $region11: #{tpu_custom_call.1} parent=1 // pred_check_branch
      %42 = sbr.rel (0) target = $region13
    $region12: #{tpu_custom_call.1} parent=1 // pred_region
      _
    $region13: #{tpu_custom_call.1} parent=1 // pred_fallthru
      _
    // Predicated region
    $region14: #{tpu_custom_call.1} parent=1 // pred_check
      _
    $region15: #{tpu_custom_call.1} parent=1 // pred_check_branch
      %44 = sbr.rel (0) target = $region17
    $region16: #{tpu_custom_call.1} parent=1 // pred_region
      %46 = vsyncadd [#allocation5], 0
      %s47 = sshll.u32 %s3, 4
      %s48 = int_to_ptr.hbm [resolvable:$true] %s47
      %s49 = sshll.u32 [#allocation6], 4
      %s50 = int_to_ptr.vmem [resolvable:$true] %s49
      %55 = dma.hbm_to_vmem [thread:$0]  %s48, 2048, %s50, [#allocation5], 128, 128, 8
    $region17: #{tpu_custom_call.1} parent=1 // pred_fallthru
      _
    // Predicated region
    $region18: #{tpu_custom_call.1} parent=1 // pred_check
      _
    $region19: #{tpu_custom_call.1} parent=1 // pred_check_branch
      %57 = sbr.rel (0) target = $region21
    $region20: #{tpu_custom_call.1} parent=1 // pred_region
      _
    $region21: #{tpu_custom_call.1} parent=1 // pred_fallthru
      _
    // Predicated region
    $region22: #{tpu_custom_call.1} parent=1 // pred_check
      _
    $region23: #{tpu_custom_call.1} parent=1 // pred_check_branch
      %59 = sbr.rel (0) target = $region25
    $region24: #{tpu_custom_call.1} parent=1 // pred_region
      %61 = vsyncadd [#allocation8], 0
      %s62 = sshll.u32 %s5, 4
      %s63 = int_to_ptr.hbm [resolvable:$true] %s62
      %s64 = sshll.u32 [#allocation7], 4
      %s65 = int_to_ptr.vmem [resolvable:$true] %s64
      %70 = dma.hbm_to_vmem [thread:$0]  %s63, 2048, %s65, [#allocation8], 128, 128, 8
    $region25: #{tpu_custom_call.1} parent=1 // pred_fallthru
      _
    // Predicated region
    $region26: #{tpu_custom_call.1} parent=1 // pred_check
      _
    $region27: #{tpu_custom_call.1} parent=1 // pred_check_branch
      %72 = sbr.rel (0) target = $region29
    $region28: #{tpu_custom_call.1} parent=1 // pred_region
      _
    $region29: #{tpu_custom_call.1} parent=1 // pred_fallthru
      _
    // Predicated region
    $region30: #{tpu_custom_call.1} parent=1 // pred_check
      _
    $region31: #{tpu_custom_call.1} parent=1 // pred_check_branch
      %74 = sbr.rel (0) target = $region33
    $region32: #{tpu_custom_call.1} parent=1 // pred_region
      %76 = vsyncadd [#allocation8], 0
      %s77 = sshll.u32 %s7, 4
      %s78 = int_to_ptr.hbm [resolvable:$true] %s77
      %s79 = sshll.u32 [#allocation9], 4
      %s80 = int_to_ptr.vmem [resolvable:$true] %s79
      %85 = dma.hbm_to_vmem [thread:$0]  %s78, 2048, %s80, [#allocation8], 128, 128, 8
    $region33: #{tpu_custom_call.1} parent=1 // pred_fallthru
      _
    // Predicated region
    $region34: #{tpu_custom_call.1} parent=1 // pred_check
      _
    $region35: #{tpu_custom_call.1} parent=1 // pred_check_branch
      %87 = sbr.rel (0) target = $region37
    $region36: #{tpu_custom_call.1} parent=1 // pred_region
      _
    $region37: #{tpu_custom_call.1} parent=1 // pred_fallthru
      _
    // Predicated region
    $region38: #{tpu_custom_call.1} parent=1 // pred_check
      _
    $region39: #{tpu_custom_call.1} parent=1 // pred_check_branch
      %89 = sbr.rel (0) target = $region41
    $region40: #{tpu_custom_call.1} parent=1 // pred_region
      %91 = dma.done [#allocation3], 128
    $region41: #{tpu_custom_call.1} parent=1 // pred_fallthru
      _
    // Predicated region
    $region42: #{tpu_custom_call.1} parent=1 // pred_check
      _
    $region43: #{tpu_custom_call.1} parent=1 // pred_check_branch
      %93 = sbr.rel (0) target = $region45
    $region44: #{tpu_custom_call.1} parent=1 // pred_region
      %95 = dma.done [#allocation5], 256
    $region45: #{tpu_custom_call.1} parent=1 // pred_fallthru
      _
    // Predicated region
    $region46: #{tpu_custom_call.1} parent=1 // pred_check
      _
    $region47: #{tpu_custom_call.1} parent=1 // pred_check_branch
      %97 = sbr.rel (0) target = $region49
    $region48: #{tpu_custom_call.1} parent=1 // pred_region
      %99 = dma.done [#allocation5], 2048
    $region49: #{tpu_custom_call.1} parent=1 // pred_fallthru
      _
    // Predicated region
    $region50: #{tpu_custom_call.1} parent=1 // pred_check
      _
    $region51: #{tpu_custom_call.1} parent=1 // pred_check_branch
      %101 = sbr.rel (0) target = $region53
    $region52: #{tpu_custom_call.1} parent=1 // pred_region
      %103 = dma.done [#allocation8], 2048
    $region53: #{tpu_custom_call.1} parent=1 // pred_fallthru
      _
    // Predicated region
    $region54: #{tpu_custom_call.1} parent=1 // pred_check
      _
    $region55: #{tpu_custom_call.1} parent=1 // pred_check_branch
      %105 = sbr.rel (0) target = $region57
    $region56: #{tpu_custom_call.1} parent=1 // pred_region
      %107 = dma.done [#allocation8], 2048
    $region57: #{tpu_custom_call.1} parent=1 // pred_fallthru
      _
    %v108 = vld [vmem:[#allocation2] sm:$0xff]
    %v109 = vld [vmem:[#allocation4] sm:$0xff]
    %v110 = vld [vmem:[#allocation4 + $0x8] sm:$0xff]
    %v111 = vld [vmem:[%s2] sm:$0x1]
    %v113 = vperm.slane %v111, 0
    %vm115 = vcmask 130048
    %v117 = vsel %vm115, %v108, 0
    %119 = vmatpush.msra.mxu0 0.0
    %120 = vmatpush.msra.mxu0 0.0
    %121 = vmatpush.msra.mxu0 0.0
    %122 = vmatpush.msra.mxu0 0.0
    %123 = vmatpush.msra.mxu0 0.0
    %124 = vmatpush.msra.mxu0 0.0
    %125 = vmatpush.msra.mxu0 0.0
    %126 = vmatpush.msra.mxu0 0.0
    %127 = vmatpush.msra.mxu0 0.0
    %128 = vmatpush.msra.mxu0 0.0
    %129 = vmatpush.msra.mxu0 0.0
    %130 = vmatpush.msra.mxu0 0.0
    %131 = vmatpush.msra.mxu0 0.0
    %132 = vmatpush.msra.mxu0 0.0
    %133 = vmatpush.msra.mxu0 %v110
    %134 = vmatpush.msra.mxu0 %v109
    %135 = vmatmul.f32.gmra.mxu0 %v117
    %v136 = vpop.f32.mrf.mxu0
    %v137 = vadd.f32 %v113, %v136
    %138 = vdwg.mxu0
    %v139 = vmax.f32 %v137, 0.0
    %v140 = vld [vmem:[#allocation6] sm:$0xff]
    %v141 = vld [vmem:[#allocation6 + $0x8] sm:$0xff]
    %v142 = vld [vmem:[#allocation6 + $0x10] sm:$0xff]
    %v143 = vld [vmem:[#allocation6 + $0x18] sm:$0xff]
    %v144 = vld [vmem:[#allocation6 + $0x20] sm:$0xff]
    %v145 = vld [vmem:[#allocation6 + $0x28] sm:$0xff]
    %v146 = vld [vmem:[#allocation6 + $0x30] sm:$0xff]
    %v147 = vld [vmem:[#allocation6 + $0x38] sm:$0xff]
    %v148 = vld [vmem:[#allocation6 + $0x40] sm:$0xff]
    %v149 = vld [vmem:[#allocation6 + $0x48] sm:$0xff]
    %v150 = vld [vmem:[#allocation6 + $0x50] sm:$0xff]
    %v151 = vld [vmem:[#allocation6 + $0x58] sm:$0xff]
    %v152 = vld [vmem:[#allocation6 + $0x60] sm:$0xff]
    %v153 = vld [vmem:[#allocation6 + $0x68] sm:$0xff]
    %v154 = vld [vmem:[#allocation6 + $0x70] sm:$0xff]
    %v155 = vld [vmem:[#allocation6 + $0x78] sm:$0xff]
    %v156 = vld [vmem:[%s4] sm:$0x1]
    %v158 = vperm.slane %v156, 0
    %160 = vmatpush.msra.mxu0 %v155
    %161 = vmatpush.msra.mxu0 %v154
    %162 = vmatpush.msra.mxu0 %v153
    %163 = vmatpush.msra.mxu0 %v152
    %164 = vmatpush.msra.mxu0 %v151
    %165 = vmatpush.msra.mxu0 %v150
    %166 = vmatpush.msra.mxu0 %v149
    %167 = vmatpush.msra.mxu0 %v148
    %168 = vmatpush.msra.mxu0 %v147
    %169 = vmatpush.msra.mxu0 %v146
    %170 = vmatpush.msra.mxu0 %v145
    %171 = vmatpush.msra.mxu0 %v144
    %172 = vmatpush.msra.mxu0 %v143
    %173 = vmatpush.msra.mxu0 %v142
    %174 = vmatpush.msra.mxu0 %v141
    %175 = vmatpush.msra.mxu0 %v140
    %176 = vmatmul.f32.gmra.mxu0 %v139
    %v177 = vpop.f32.mrf.mxu0
    %v178 = vadd.f32 %v158, %v177
    %179 = vdwg.mxu0
    %v180 = vmax.f32 %v178, 0.0
    %v181 = vld [vmem:[#allocation7] sm:$0xff]
    %v182 = vld [vmem:[#allocation7 + $0x8] sm:$0xff]
    %v183 = vld [vmem:[#allocation7 + $0x10] sm:$0xff]
    %v184 = vld [vmem:[#allocation7 + $0x18] sm:$0xff]
    %v185 = vld [vmem:[#allocation7 + $0x20] sm:$0xff]
    %v186 = vld [vmem:[#allocation7 + $0x28] sm:$0xff]
    %v187 = vld [vmem:[#allocation7 + $0x30] sm:$0xff]
    %v188 = vld [vmem:[#allocation7 + $0x38] sm:$0xff]
    %v189 = vld [vmem:[#allocation7 + $0x40] sm:$0xff]
    %v190 = vld [vmem:[#allocation7 + $0x48] sm:$0xff]
    %v191 = vld [vmem:[#allocation7 + $0x50] sm:$0xff]
    %v192 = vld [vmem:[#allocation7 + $0x58] sm:$0xff]
    %v193 = vld [vmem:[#allocation7 + $0x60] sm:$0xff]
    %v194 = vld [vmem:[#allocation7 + $0x68] sm:$0xff]
    %v195 = vld [vmem:[#allocation7 + $0x70] sm:$0xff]
    %v196 = vld [vmem:[#allocation7 + $0x78] sm:$0xff]
    %v197 = vld [vmem:[%s6] sm:$0x1]
    %v199 = vperm.slane %v197, 0
    %201 = vmatpush.msra.mxu0 %v196
    %202 = vmatpush.msra.mxu0 %v195
    %203 = vmatpush.msra.mxu0 %v194
    %204 = vmatpush.msra.mxu0 %v193
    %205 = vmatpush.msra.mxu0 %v192
    %206 = vmatpush.msra.mxu0 %v191
    %207 = vmatpush.msra.mxu0 %v190
    %208 = vmatpush.msra.mxu0 %v189
    %209 = vmatpush.msra.mxu0 %v188
    %210 = vmatpush.msra.mxu0 %v187
    %211 = vmatpush.msra.mxu0 %v186
    %212 = vmatpush.msra.mxu0 %v185
    %213 = vmatpush.msra.mxu0 %v184
    %214 = vmatpush.msra.mxu0 %v183
    %215 = vmatpush.msra.mxu0 %v182
    %216 = vmatpush.msra.mxu0 %v181
    %217 = vmatmul.f32.gmra.mxu0 %v180
    %v218 = vpop.f32.mrf.mxu0
    %v219 = vadd.f32 %v199, %v218
    %220 = vdwg.mxu0
    %v221 = vmax.f32 %v219, 0.0
    %v222 = vld [vmem:[#allocation9] sm:$0xff]
    %v223 = vld [vmem:[#allocation9 + $0x8] sm:$0xff]
    %v224 = vld [vmem:[#allocation9 + $0x10] sm:$0xff]
    %v225 = vld [vmem:[#allocation9 + $0x18] sm:$0xff]
    %v226 = vld [vmem:[#allocation9 + $0x20] sm:$0xff]
    %v227 = vld [vmem:[#allocation9 + $0x28] sm:$0xff]
    %v228 = vld [vmem:[#allocation9 + $0x30] sm:$0xff]
    %v229 = vld [vmem:[#allocation9 + $0x38] sm:$0xff]
    %v230 = vld [vmem:[#allocation9 + $0x40] sm:$0xff]
    %v231 = vld [vmem:[#allocation9 + $0x48] sm:$0xff]
    %v232 = vld [vmem:[#allocation9 + $0x50] sm:$0xff]
    %v233 = vld [vmem:[#allocation9 + $0x58] sm:$0xff]
    %v234 = vld [vmem:[#allocation9 + $0x60] sm:$0xff]
    %v235 = vld [vmem:[#allocation9 + $0x68] sm:$0xff]
    %v236 = vld [vmem:[#allocation9 + $0x70] sm:$0xff]
    %v237 = vld [vmem:[#allocation9 + $0x78] sm:$0xff]
    %v238 = vld [vmem:[%s8] sm:$0x1]
    %v240 = vperm.slane %v238, 0
    %242 = vmatpush.msra.mxu0 %v237
    %243 = vmatpush.msra.mxu0 %v236
    %244 = vmatpush.msra.mxu0 %v235
    %245 = vmatpush.msra.mxu0 %v234
    %246 = vmatpush.msra.mxu0 %v233
    %247 = vmatpush.msra.mxu0 %v232
    %248 = vmatpush.msra.mxu0 %v231
    %249 = vmatpush.msra.mxu0 %v230
    %250 = vmatpush.msra.mxu0 %v229
    %251 = vmatpush.msra.mxu0 %v228
    %252 = vmatpush.msra.mxu0 %v227
    %253 = vmatpush.msra.mxu0 %v226
    %254 = vmatpush.msra.mxu0 %v225
    %255 = vmatpush.msra.mxu0 %v224
    %256 = vmatpush.msra.mxu0 %v223
    %257 = vmatpush.msra.mxu0 %v222
    %258 = vmatmul.f32.gmra.mxu0 %v221
    %v259 = vpop.f32.mrf.mxu0
    %v260 = vadd.f32 %v240, %v259
    %261 = vdwg.mxu0
    %vm262 = vcmask 31744
    %263 = vst.msk [vmem:[%s9] sm:$0xff] %vm262, %v260
    // Predicated region
    $region58: #{tpu_custom_call.1} parent=1 // pred_check
      _
    $region59: #{tpu_custom_call.1} parent=1 // pred_check_branch
      %265 = sbr.rel (0) target = $region61
    $region60: #{tpu_custom_call.1} parent=1 // pred_region
      _
    $region61: #{tpu_custom_call.1} parent=1 // pred_fallthru
      _
    // Predicated region
    $region62: #{tpu_custom_call.1} parent=1 // pred_check
      _
    $region63: #{tpu_custom_call.1} parent=1 // pred_check_branch
      %267 = sbr.rel (0) target = $region65
    $region64: #{tpu_custom_call.1} parent=1 // pred_region
      _
    $region65: #{tpu_custom_call.1} parent=1 // pred_fallthru
      _
    %268 = vsyncpa [#allocation3], 1
    %269 = vsyncpa [#allocation5], 1
    %270 = vsyncpa [#allocation8], 1

</llo_original>
